<compile_context>
chip_gen: v7x
topology: tpu7x:2x2x1
jax: 0.10.0
libtpu: 0.0.40
codegen_flags: <defaults>
</compile_context>

<pallas_src>
import functools
import math

import jax
import jax.numpy as jnp
from jax.experimental import pallas as pl
from jax.experimental.pallas import tpu as pltpu


LANE = 128
SUBLANE = 8
# ~1 MiB of f32 per tile: double-buffered x + bits + out streams (~24 B/elem)
# stay well under the v5e 16 MiB scoped-VMEM default (and v7x's 32 MiB).
_TARGET_TILE_ELEMS = 256 * 1024


def make_sinusoidal_pe(max_len: int, d_model: int) -> jnp.ndarray:
    """Deterministic sinusoidal PE table, shape (1, max_len, d_model)."""
    position = jnp.arange(0, max_len, dtype=jnp.float32)[:, None]           # (L, 1)
    div_term = jnp.exp(
        jnp.arange(0, d_model, 2, dtype=jnp.float32) * (-math.log(10000.0) / d_model)
    )                                                                        # (D/2,)
    pe = jnp.zeros((max_len, d_model), dtype=jnp.float32)
    pe = pe.at[:, 0::2].set(jnp.sin(position * div_term))
    pe = pe.at[:, 1::2].set(jnp.cos(position * div_term))
    return pe[None, :, :]                                                    # (1, L, D)


def _add_pe_kernel(x_ref, pe_ref, o_ref):
    # pe tile is (1, TC) and broadcasts over the row (batch) dim of the x tile.
    o_ref[...] = x_ref[...] + pe_ref[...]


def _add_pe_dropout_kernel(x_ref, pe_ref, bits_ref, o_ref, *, threshold, scale):
    y = x_ref[...] + pe_ref[...]
    # Inverted dropout via integer threshold: P(bits >= threshold) = 1 - p.
    keep = bits_ref[...] >= jnp.uint32(threshold)
    o_ref[...] = jnp.where(keep, y * jnp.asarray(scale, dtype=y.dtype),
                           jnp.zeros_like(y))


def _choose_tiles(rows: int, cols: int):
    """Pick a (row, col) block shape satisfying the (8, 128) constraint."""
    # Row axis = batch: small in practice; the full dim is always legal.
    if rows % SUBLANE == 0 and rows > SUBLANE:
        tr = SUBLANE
    else:
        tr = rows
    # Col axis = flattened S*D: need a multiple of 128 dividing cols, else full.
    if cols % LANE != 0:
        return tr, cols
    max_cols = max(LANE, (_TARGET_TILE_ELEMS // max(tr, 1)) // LANE * LANE)
    tc = cols
    if tc > max_cols:
        tc = LANE
        d = max_cols
        while d >= LANE:
            if cols % d == 0:
                tc = d
                break
            d -= LANE
    return tr, tc


def positional_encoder(x, pe, *, p=0.1, training=False, rng_key=None):
    """x: (B, S, D).  pe: (1, max_len, D) sinusoidal table.  Returns (B, S, D)."""
    B, S, D = x.shape
    C = S * D

    if training and p >= 1.0:          # torch: p=1 zeroes everything
        return jnp.zeros_like(x)

    # Lane-dense flattened view: last dim S*D (multiple of 128 for typical
    # transformer configs) so output stores are full-lane, unmasked.
    x2 = x.reshape(B, C)
    pe2 = pe[:, :S, :].reshape(1, C).astype(x.dtype)

    tr, tc = _choose_tiles(B, C)
    grid = (pl.cdiv(B, tr), pl.cdiv(C, tc))

    x_spec = pl.BlockSpec((tr, tc), lambda i, j: (i, j))
    pe_spec = pl.BlockSpec((1, tc), lambda i, j: (0, j))   # block-invariant over batch tiles
    bits_spec = pl.BlockSpec((tr, tc), lambda i, j: (i, j))
    out_spec = pl.BlockSpec((tr, tc), lambda i, j: (i, j))
    cparams = pltpu.CompilerParams(
        dimension_semantics=("parallel", "parallel"),  # v7x: shard across both TCs
    )

    if not (training and p > 0.0):
        out2 = pl.pallas_call(
            _add_pe_kernel,
            out_shape=jax.ShapeDtypeStruct((B, C), x.dtype),
            grid=grid,
            in_specs=[x_spec, pe_spec],
            out_specs=out_spec,
            compiler_params=cparams,
        )(x2, pe2)
    else:
        if rng_key is None:
            rng_key = jax.random.PRNGKey(0)
        # TODO(synk): switch to the on-chip PRNG (pltpu.prng_seed /
        # prng_random_bits) to avoid streaming the mask bits from HBM; those
        # primitives do not lower in the interpret/CPU execution path.
        bits = jax.random.bits(rng_key, (B, C), dtype=jnp.uint32)
        threshold = min(int(round(float(p) * 2.0 ** 32)), 2 ** 32 - 1)
        scale = 1.0 / (1.0 - float(p))
        kernel = functools.partial(_add_pe_dropout_kernel,
                                   threshold=threshold, scale=scale)
        out2 = pl.pallas_call(
            kernel,
            out_shape=jax.ShapeDtypeStruct((B, C), x.dtype),
            grid=grid,
            in_specs=[x_spec, pe_spec, bits_spec],
            out_specs=out_spec,
            compiler_params=cparams,
        )(x2, pe2, bits)

    return out2.reshape(B, S, D)


if __name__ == "__main__":
    # Small shapes consistent with the module: batch=2, seq=8, d_model=32, max_len=16.
    B, S, D, MAX_LENGTH = 2, 8, 32, 16

    key = jax.random.PRNGKey(0)
    kx, kd = jax.random.split(key)
    x = jax.random.normal(kx, (B, S, D), dtype=jnp.float32)
    pe = make_sinusoidal_pe(MAX_LENGTH, D)

    ref = x + pe[:, :S, :]

    # Eval mode (dropout = identity): exact match vs pure-JAX reference.
    out_eval = jax.block_until_ready(positional_encoder(x, pe, p=0.1, training=False))
    assert out_eval.shape == (B, S, D)
    assert jnp.allclose(out_eval, ref, atol=1e-6), "eval-mode mismatch vs reference"

    # Training mode (inverted dropout): verify against the exact same mask
    # reconstructed outside the kernel.
    p = 0.1
    out_train = jax.block_until_ready(
        positional_encoder(x, pe, p=p, training=True, rng_key=kd))
    assert out_train.shape == (B, S, D)
    bits_ref = jax.random.bits(kd, (B, S * D), dtype=jnp.uint32).reshape(B, S, D)
    threshold = min(int(round(p * 2.0 ** 32)), 2 ** 32 - 1)
    keep = bits_ref >= jnp.uint32(threshold)
    expected = jnp.where(keep, ref / (1.0 - p), 0.0)
    assert jnp.allclose(out_train, expected, atol=1e-5), "training-mode dropout mismatch"

    print("KERNEL_OK")
</pallas_src>

<mosaic_0001>
module attributes {stable_mosaic.version = 11 : i64} {
  func.func @_add_pe_kernel(%arg0: i32, %arg1: i32, %arg2: memref<2x256xf32, #tpu.memory_space<vmem>>, %arg3: memref<1x256xf32, #tpu.memory_space<vmem>>, %arg4: memref<2x256xf32, #tpu.memory_space<vmem>>) attributes {dimension_semantics = [#tpu.dimension_semantics<parallel>, #tpu.dimension_semantics<parallel>], iteration_bounds = array<i64: 1, 1>, scalar_prefetch = 0 : i64, scratch_operands = 0 : i64, tpu.core_type = #tpu.core_type<tc>, window_params = [{transform_indices = @transform_0, window_bounds = array<i64: 2, 256>}, {transform_indices = @transform_1, window_bounds = array<i64: 1, 256>}, {transform_indices = @transform_2, window_bounds = array<i64: 2, 256>}]} {
    %c0 = arith.constant 0 : index
    %c0_0 = arith.constant 0 : index
    %0 = vector.load %arg2[%c0, %c0_0] : memref<2x256xf32, #tpu.memory_space<vmem>>, vector<2x256xf32>
    %c0_1 = arith.constant 0 : index
    %c0_2 = arith.constant 0 : index
    %1 = vector.load %arg3[%c0_1, %c0_2] : memref<1x256xf32, #tpu.memory_space<vmem>>, vector<1x256xf32>
    %2 = vector.broadcast %1 : vector<1x256xf32> to vector<2x256xf32>
    %3 = arith.addf %0, %2 : vector<2x256xf32>
    %c0_3 = arith.constant 0 : index
    %c0_4 = arith.constant 0 : index
    %4 = vector.load %arg4[%c0_3, %c0_4] : memref<2x256xf32, #tpu.memory_space<vmem>>, vector<2x256xf32>
    tpu.vector_store %arg4[%c0_3, %c0_4], %3 {strides = array<i32>} : memref<2x256xf32, #tpu.memory_space<vmem>>, vector<2x256xf32>,
    return
  }
  func.func @transform_0(%arg0: i32, %arg1: i32) -> (i32, i32) {
    %c0_i32 = arith.constant 0 : i32
    return %arg0, %arg1 : i32, i32
  }
  func.func @transform_1(%arg0: i32, %arg1: i32) -> (i32, i32) {
    %c0_i32 = arith.constant 0 : i32
    %c0_i32_0 = arith.constant 0 : i32
    return %c0_i32, %arg1 : i32, i32
  }
  func.func @transform_2(%arg0: i32, %arg1: i32) -> (i32, i32) {
    %c0_i32 = arith.constant 0 : i32
    return %arg0, %arg1 : i32, i32
  }
}

</mosaic_0001>

<llo_original>
// kernel: tpu_custom_call.1
$region0: #{tpu_custom_call.1}
  #allocation0 [shape = 'u32[]', space=smem, size = 0x4, offset = 0x4, fixed_abs, tag = 'smem constant byte address 0x4 - core index']
  #allocation1 [shape = 'u32[144,128]{1,0:T(1,128)}', space=vmem, size = 0x12000, scoped, tag = 'internal scratch']
  %s0 = inlined_call_operand.hbm [shape: f32[2,256], index: 0, kind: input, shape index: {}]
  %s1 = inlined_call_operand.vmem [shape: f32[1,256], index: 1, kind: input, shape index: {}]
  %s2 = inlined_call_operand.hbm [shape: f32[2,256], index: 2, kind: output, shape index: {}]
  %s3 = sld [smem:[#allocation0]]
  $region22: #{tpu_custom_call.1} parent=0
    _
  %s5 = ssub.s32 1, %s3
  %s6 = scalar_select 0, %s5, %s3
  $region1: #{tpu_custom_call.1} parent=0
    #allocation2 [shape = 'u8[2048]{0}', space=vmem, size = 0x800, scoped, tag = 'input window, operand 0, single buffered']
    #allocation3 [shape = 's32[1]{0}', space=sflag, size = 0x4, scoped, tag = 'scoped memory for tpu_custom_call.1']
    #allocation4 [shape = 's32[1]{0}', space=sflag, size = 0x4, scoped, tag = 'scoped memory for tpu_custom_call.1']
    #allocation5 [shape = 'u8[2048]{0}', space=vmem, size = 0x800, scoped, tag = 'output window, operand 0, single buffered']
    %7 = vsyncpa [#allocation3], 0
    %8 = vsyncpa [#allocation4], 0
    // Predicated region
    $region2: #{tpu_custom_call.1} parent=1 // pred_check
      _
    $region3: #{tpu_custom_call.1} parent=1 // pred_check_branch
      %10 = sbr.rel (0) target = $region5
    $region4: #{tpu_custom_call.1} parent=1 // pred_region
      %s12 = ssub.s32 64, 64
      %13 = vsyncadd [#allocation3], %s12
      %s15 = sshll.u32 [#allocation2], 4
      %s16 = int_to_ptr.vmem [resolvable:$true] %s15
      %18 = dma.hbm_to_vmem [thread:$0]  %s0, 64, %s16, [#allocation3]
    $region5: #{tpu_custom_call.1} parent=1 // pred_fallthru
      _
    // Predicated region
    $region6: #{tpu_custom_call.1} parent=1 // pred_check
      _
    $region7: #{tpu_custom_call.1} parent=1 // pred_check_branch
      %20 = sbr.rel (0) target = $region9
    $region8: #{tpu_custom_call.1} parent=1 // pred_region
      _
    $region9: #{tpu_custom_call.1} parent=1 // pred_fallthru
      _
    // Predicated region
    $region10: #{tpu_custom_call.1} parent=1 // pred_check
      _
    $region11: #{tpu_custom_call.1} parent=1 // pred_check_branch
      %22 = sbr.rel (0) target = $region13
    $region12: #{tpu_custom_call.1} parent=1 // pred_region
      %23 = dma.done [#allocation3], 64
    $region13: #{tpu_custom_call.1} parent=1 // pred_fallthru
      _
    %v24 = vld [vmem:[#allocation2] sm:$0xf]
    %v25 = vld [vmem:[%s1] sm:$0x3]
    %v27 = vlaneseq
    %v28 = vshrl.u32 %v27, 7
    %v29 = vsub.s32 0, %v28
    %v30 = vrot.slane %v25, %v29
    %v31 = vlaneseq
    %v32 = vshrl.u32 %v31, 7
    %v33 = vsub.s32 1, %v32
    %v34 = vrot.slane %v25, %v33
    %v35 = vcombine.low %v30, %v34
    %v37 = vunpack.c.l.s4 1983009808
    %v38 = vunpack.c.0.s8 %v37
    %v39 = vlaneseq
    %v40 = vshrl.u32 %v39, 7
    %v41 = vsub.s32 %v38, %v40
    %v42 = vrot.slane %v35, %v41
    %v44 = vadd.f32 %v24, %v42
    %45 = vst [vmem:[#allocation5] sm:$0xf] %v44
    // Predicated region
    $region14: #{tpu_custom_call.1} parent=1 // pred_check
      _
    $region15: #{tpu_custom_call.1} parent=1 // pred_check_branch
      %47 = sbr.rel (0) target = $region17
    $region16: #{tpu_custom_call.1} parent=1 // pred_region
      %s49 = ssub.s32 64, 64
      %50 = vsyncadd [#allocation4], %s49
      %s52 = sshll.u32 [#allocation5], 4
      %s53 = int_to_ptr.vmem [resolvable:$true] %s52
      %55 = dma.vmem_to_hbm [thread:$0]  %s53, 64, %s2, [#allocation4]
    $region17: #{tpu_custom_call.1} parent=1 // pred_fallthru
      _
    // Predicated region
    $region18: #{tpu_custom_call.1} parent=1 // pred_check
      _
    $region19: #{tpu_custom_call.1} parent=1 // pred_check_branch
      %57 = sbr.rel (0) target = $region21
    $region20: #{tpu_custom_call.1} parent=1 // pred_region
      %58 = dma.done [#allocation4], 64
    $region21: #{tpu_custom_call.1} parent=1 // pred_fallthru
      _
    %59 = vsyncpa [#allocation3], 1
    %60 = vsyncpa [#allocation4], 1

</llo_original>
